<compile_context>
chip_gen: v7x
topology: tpu7x:2x2x1
jax: 0.10.0
libtpu: 0.0.40
codegen_flags: <defaults>
</compile_context>

<pallas_src>
import functools
import math

import jax
import jax.numpy as jnp
from jax import lax
from jax.experimental import pallas as pl
from jax.experimental.pallas import tpu as pltpu


def _round_up(v, m):
    return (v + m - 1) // m * m


# ---------------------------------------------------------------------------
# Pallas kernel: in-kernel radius mask + fused 2-layer MLP + masked max over K
# ---------------------------------------------------------------------------
def _pointconv_kernel(cen_ref, cenw_ref, post_ref, xw_ref, w2_ref, b2_ref,
                      out_ref, *, r2, use_bf16):
    # cen_ref  : (1, tc, 3)    sampled-center coordinates for this tile
    # cenw_ref : (1, tc, H)    centers @ W1[C:C+3]            (precomputed per center)
    # post_ref : (1, 3, Np)    cloud point coords, transposed (lane-dense)
    # xw_ref   : (1, Np, H)    x_j@W1[:C] + pos_j@W1[C:] + b1 (precomputed per point)
    # w2_ref   : (H, Cout),  b2_ref : (1, Cout)
    # out_ref  : (1, Cout, tc) transposed (lane-dense) output
    centers = cen_ref[0]                       # (tc, 3)
    cenw = cenw_ref[0]                         # (tc, H)
    pos_t = post_ref[0]                        # (3, Np)
    xw = xw_ref[0]                             # (Np, H)
    tc = centers.shape[0]
    Np = pos_t.shape[1]
    H = xw.shape[1]
    Cout = w2_ref.shape[1]

    # squared distance center_i <-> point_j, built on the VPU from 2-D slabs
    # (no (.., .., 3) lane-sparse tensors ever materialize).
    d2 = jnp.zeros((tc, Np), jnp.float32)
    for c in range(3):
        dc = pos_t[c:c + 1, :] - centers[:, c:c + 1]       # (1,Np)-(tc,1) -> (tc,Np)
        d2 = d2 + dc * dc
    mask = (d2 <= r2).astype(jnp.float32)                  # (tc, Np)

    # layer 1:  relu(xw_j - cenw_i)  ==  relu(W1 @ [x_j, pos_j - pos_i] + b1)
    h = jnp.maximum(xw[None, :, :] - cenw[:, None, :], 0.0)   # (tc, Np, H) f32

    # layer 2 on the MXU as one flat (tc*Np, H) @ (H, Cout) matmul.
    h2 = h.reshape(tc * Np, H)
    w2 = w2_ref[...]
    if use_bf16:                               # bf16 inputs, f32 accumulate
        h2 = h2.astype(jnp.bfloat16)
        w2 = w2.astype(jnp.bfloat16)
    o = jnp.dot(h2, w2, preferred_element_type=jnp.float32) + b2_ref[...]
    o = jnp.maximum(o, 0.0).reshape(tc, Np, Cout)          # f32 epilogue (v5e-safe)

    # masked max over neighbors: outputs are post-ReLU (>= 0) and every center is
    # its own neighbor (d2 = 0 <= r^2), so multiplying by the mask is exact.
    o = o * mask[:, :, None]
    out_ref[0] = jnp.max(o, axis=1).T.astype(out_ref.dtype)   # (Cout, tc) store


def _choose_center_tile(n_sample, Np, H, Cout, budget_bytes=20 * 1024 * 1024):
    """Pick the per-step center tile `tc` and padded center count Msp.

    Dominant per-step VMEM: the (tc, Np, H) hidden and (tc, Np, Cout) layer-2
    activations (lanes pad to 128).  Budget stays well inside v7x's 64 MiB VMEM;
    v5e/v6e (128 MiB) get the same, still-large tile.
    """
    lane = lambda c: max(_round_up(c, 128), 128)
    per_center = Np * 4 * (lane(H) + lane(Cout) + 2 * 128)
    cap = max(8, budget_bytes // per_center)
    if cap >= n_sample:                         # whole cloud's centers in one tile
        msp = _round_up(n_sample, 8)
        return msp, msp
    tc = max(128, cap // 128 * 128)             # lane-dense output tiles when tiling
    # TODO(synk): for very large clouds (huge Np) also chunk the neighbor axis
    #             inside the kernel instead of only shrinking tc.
    return tc, _round_up(n_sample, tc)


def pointconv_pallas(centers_p, cenw_p, pos_t, xw, w2, b2, *, r, tc):
    B, Msp, _ = centers_p.shape
    Np = pos_t.shape[2]
    H = xw.shape[2]
    Cout = w2.shape[1]

    out_t = pl.pallas_call(
        functools.partial(_pointconv_kernel, r2=float(r) ** 2, use_bf16=True),
        out_shape=jax.ShapeDtypeStruct((B, Cout, Msp), jnp.float32),
        grid=(B, Msp // tc),
        in_specs=[
            pl.BlockSpec((1, tc, 3), lambda b, i: (b, i, 0)),    # centers
            pl.BlockSpec((1, tc, H), lambda b, i: (b, i, 0)),    # centers @ W1p
            pl.BlockSpec((1, 3, Np), lambda b, i: (b, 0, 0)),    # cloud points (T)
            pl.BlockSpec((1, Np, H), lambda b, i: (b, 0, 0)),    # per-point precompute
            pl.BlockSpec((H, Cout), lambda b, i: (0, 0)),        # w2
            pl.BlockSpec((1, Cout), lambda b, i: (0, 0)),        # b2
        ],
        out_specs=pl.BlockSpec((1, Cout, tc), lambda b, i: (b, 0, i)),
        compiler_params=pltpu.CompilerParams(
            dimension_semantics=("parallel", "parallel"),
            vmem_limit_bytes=48 * 1024 * 1024),   # < 64 MiB physical on v7x
    )(centers_p, cenw_p, pos_t, xw, w2, b2)
    return out_t                                  # (B, Cout, Msp)


# ---------------------------------------------------------------------------
# Farthest point sampling (sequential, data-dependent -> plain JAX glue)
# ---------------------------------------------------------------------------
def _fps_one_cloud(pos_b, n_sample):
    # pos_b: (N, 3); deterministic start at local index 0.
    # TODO(synk): torch_geometric fps uses a random start point by default; we use a
    #             deterministic start for reproducibility.
    # TODO(synk): for large N this sequential fori_loop (vmapped across clouds)
    #             becomes the wall-clock bottleneck; a Pallas FPS would be next.
    def d2(p):
        diff = pos_b - p[None, :]
        return jnp.sum(diff * diff, axis=-1)

    sel0 = jnp.zeros((n_sample,), jnp.int32)
    min_d0 = d2(pos_b[0])

    def body(t, carry):
        sel, min_d = carry
        nxt = jnp.argmax(min_d).astype(jnp.int32)
        sel = sel.at[t].set(nxt)
        min_d = jnp.minimum(min_d, d2(pos_b[nxt]))
        return sel, min_d

    sel, _ = lax.fori_loop(1, n_sample, body, (sel0, min_d0))
    return sel


# ---------------------------------------------------------------------------
# SAModule forward
# ---------------------------------------------------------------------------
def sa_module_forward(x, pos, batch, *, B, N, ratio, r, params):
    """x:(B*N,C) pos:(B*N,3) batch:(B*N,) -> (x_out:(M,Cout), pos_out:(M,3), batch_out:(M,))."""
    C = x.shape[1]
    H = params["w1"].shape[1]
    Cout = params["w2"].shape[1]
    x_b = x.reshape(B, N, C).astype(jnp.float32)
    pos_b = pos.reshape(B, N, 3).astype(jnp.float32)
    n_sample = int(math.ceil(ratio * N))

    # fps per cloud (batched across clouds by vmap)
    idx_local = jax.vmap(lambda p: _fps_one_cloud(p, n_sample))(pos_b)     # (B, Ms)
    centers = jnp.take_along_axis(pos_b, idx_local[:, :, None], axis=1)    # (B, Ms, 3)

    # --- pad neighbor points to a sublane multiple with copies of point 0
    #     (exact: duplicates never change a max over neighbors) ---------------
    Np = _round_up(N, 8)
    if Np != N:
        padn = Np - N
        pos_pad = jnp.concatenate(
            [pos_b, jnp.broadcast_to(pos_b[:, :1], (B, padn, 3))], axis=1)
        x_pad = jnp.concatenate(
            [x_b, jnp.broadcast_to(x_b[:, :1], (B, padn, C))], axis=1)
    else:
        pos_pad, x_pad = pos_b, x_b

    # --- hoisted layer-1 precompute: once per point / per center, not per edge
    w1, b1 = params["w1"], params["b1"]                    # (C+3, H), (1, H)
    w1x, w1p = w1[:C, :], w1[C:, :]
    xw = x_pad @ w1x + pos_pad @ w1p + b1                  # (B, Np, H)
    pos_t = jnp.transpose(pos_pad, (0, 2, 1))              # (B, 3, Np) lane-dense

    # --- pad / tile centers (pad rows are copies of point 0, discarded later) -
    tc, Msp = _choose_center_tile(n_sample, Np, H, Cout)
    if Msp != n_sample:
        padm = Msp - n_sample
        centers_p = jnp.concatenate(
            [centers, jnp.broadcast_to(pos_b[:, :1], (B, padm, 3))], axis=1)
    else:
        centers_p = centers
    cenw_p = centers_p @ w1p                               # (B, Msp, H)

    out_t = pointconv_pallas(centers_p, cenw_p, pos_t, xw,
                             params["w2"], params["b2"], r=r, tc=tc)

    # radius(..., max_num_neighbors=64) cap never binds when N <= 64 per cloud.
    # TODO(synk): for N > 64 torch_geometric subsamples neighbors; the dense mask
    #             here uses all in-radius neighbors instead.
    x_out = jnp.transpose(out_t[:, :, :n_sample], (0, 2, 1)).reshape(B * n_sample, Cout)
    pos_out = centers.reshape(B * n_sample, 3)
    batch_out = jnp.repeat(jnp.arange(B, dtype=batch.dtype), n_sample)
    return x_out, pos_out, batch_out


# ---------------------------------------------------------------------------
# Deterministic parameter init + example run
# ---------------------------------------------------------------------------
def init_params(key, c_in, hidden, c_out):
    k1, k2, k3, k4 = jax.random.split(key, 4)
    s1 = 1.0 / math.sqrt(c_in)
    s2 = 1.0 / math.sqrt(hidden)
    return {
        "w1": jax.random.uniform(k1, (c_in, hidden), jnp.float32, -s1, s1),
        "b1": jax.random.uniform(k2, (1, hidden), jnp.float32, -s1, s1),
        "w2": jax.random.uniform(k3, (hidden, c_out), jnp.float32, -s2, s2),
        "b2": jax.random.uniform(k4, (1, c_out), jnp.float32, -s2, s2),
    }


if __name__ == "__main__":
    key = jax.random.PRNGKey(0)
    B, N, C = 2, 16, 4          # 2 clouds x 16 points, 4 input feature channels
    H, COUT = 32, 32            # the `nn` MLP: Lin(7,32)-ReLU-Lin(32,32)-ReLU
    RATIO, R = 0.5, 0.75

    k_pos, k_x, k_p = jax.random.split(key, 3)
    pos = jax.random.uniform(k_pos, (B * N, 3), jnp.float32)
    x = jax.random.normal(k_x, (B * N, C), jnp.float32)
    batch = jnp.repeat(jnp.arange(B, dtype=jnp.int32), N)

    params = init_params(k_p, C + 3, H, COUT)

    x_out, pos_out, batch_out = sa_module_forward(
        x, pos, batch, B=B, N=N, ratio=RATIO, r=R, params=params)
    jax.block_until_ready((x_out, pos_out, batch_out))

    M = B * int(math.ceil(RATIO * N))
    assert x_out.shape == (M, COUT)
    assert pos_out.shape == (M, 3)
    assert batch_out.shape == (M,)
    assert bool(jnp.all(jnp.isfinite(x_out)))
    assert bool(jnp.all(x_out >= 0.0))          # post-ReLU outputs
    print("KERNEL_OK")
</pallas_src>

<mosaic_0001>
module attributes {stable_mosaic.version = 11 : i64} {
  func.func @_pointconv_kernel(%arg0: i32, %arg1: i32, %arg2: memref<1x8x3xf32, #tpu.memory_space<vmem>>, %arg3: memref<1x8x32xf32, #tpu.memory_space<vmem>>, %arg4: memref<1x3x16xf32, #tpu.memory_space<vmem>>, %arg5: memref<1x16x32xf32, #tpu.memory_space<vmem>>, %arg6: memref<32x32xf32, #tpu.memory_space<vmem>>, %arg7: memref<1x32xf32, #tpu.memory_space<vmem>>, %arg8: memref<1x32x8xf32, #tpu.memory_space<vmem>>) attributes {dimension_semantics = [#tpu.dimension_semantics<parallel>, #tpu.dimension_semantics<parallel>], iteration_bounds = array<i64: 2, 1>, scalar_prefetch = 0 : i64, scratch_operands = 0 : i64, tpu.core_type = #tpu.core_type<tc>, window_params = [{transform_indices = @transform_0, window_bounds = array<i64: 1, 8, 3>}, {transform_indices = @transform_1, window_bounds = array<i64: 1, 8, 32>}, {transform_indices = @transform_2, window_bounds = array<i64: 1, 3, 16>}, {transform_indices = @transform_3, window_bounds = array<i64: 1, 16, 32>}, {pipeline_mode = #tpu.pipeline_mode<synchronous>, transform_indices = @transform_4, window_bounds = array<i64: 32, 32>}, {pipeline_mode = #tpu.pipeline_mode<synchronous>, transform_indices = @transform_5, window_bounds = array<i64: 1, 32>}, {transform_indices = @transform_6, window_bounds = array<i64: 1, 32, 8>}]} {
    %c0 = arith.constant 0 : index
    %c0_0 = arith.constant 0 : index
    %c0_1 = arith.constant 0 : index
    %0 = vector.load %arg2[%c0, %c0_0, %c0_1] : memref<1x8x3xf32, #tpu.memory_space<vmem>>, vector<1x8x3xf32>
    %1 = vector.shape_cast %0 : vector<1x8x3xf32> to vector<8x3xf32>
    %c0_2 = arith.constant 0 : index
    %c0_3 = arith.constant 0 : index
    %c0_4 = arith.constant 0 : index
    %2 = vector.load %arg3[%c0_2, %c0_3, %c0_4] : memref<1x8x32xf32, #tpu.memory_space<vmem>>, vector<1x8x32xf32>
    %3 = vector.shape_cast %2 : vector<1x8x32xf32> to vector<8x32xf32>
    %c0_5 = arith.constant 0 : index
    %c0_6 = arith.constant 0 : index
    %c0_7 = arith.constant 0 : index
    %4 = vector.load %arg4[%c0_5, %c0_6, %c0_7] : memref<1x3x16xf32, #tpu.memory_space<vmem>>, vector<1x3x16xf32>
    %5 = vector.shape_cast %4 : vector<1x3x16xf32> to vector<3x16xf32>
    %c0_8 = arith.constant 0 : index
    %c0_9 = arith.constant 0 : index
    %c0_10 = arith.constant 0 : index
    %6 = vector.load %arg5[%c0_8, %c0_9, %c0_10] : memref<1x16x32xf32, #tpu.memory_space<vmem>>, vector<1x16x32xf32>
    %7 = vector.shape_cast %6 : vector<1x16x32xf32> to vector<16x32xf32>
    %cst = arith.constant 0.000000e+00 : f32
    %8 = vector.broadcast %cst : f32 to vector<8x16xf32>
    %9 = vector.extract_strided_slice %5 {offsets = [0, 0], sizes = [1, 16], strides = [1, 1]} : vector<3x16xf32> to vector<1x16xf32>
    %10 = vector.extract_strided_slice %1 {offsets = [0, 0], sizes = [8, 1], strides = [1, 1]} : vector<8x3xf32> to vector<8x1xf32>
    %11 = vector.broadcast %9 : vector<1x16xf32> to vector<8x16xf32>
    %12 = vector.broadcast %10 : vector<8x1xf32> to vector<8x16xf32>
    %13 = arith.subf %11, %12 : vector<8x16xf32>
    %14 = arith.mulf %13, %13 : vector<8x16xf32>
    %15 = arith.addf %8, %14 : vector<8x16xf32>
    %16 = vector.extract_strided_slice %5 {offsets = [1, 0], sizes = [1, 16], strides = [1, 1]} : vector<3x16xf32> to vector<1x16xf32>
    %17 = vector.extract_strided_slice %1 {offsets = [0, 1], sizes = [8, 1], strides = [1, 1]} : vector<8x3xf32> to vector<8x1xf32>
    %18 = vector.broadcast %16 : vector<1x16xf32> to vector<8x16xf32>
    %19 = vector.broadcast %17 : vector<8x1xf32> to vector<8x16xf32>
    %20 = arith.subf %18, %19 : vector<8x16xf32>
    %21 = arith.mulf %20, %20 : vector<8x16xf32>
    %22 = arith.addf %15, %21 : vector<8x16xf32>
    %23 = vector.extract_strided_slice %5 {offsets = [2, 0], sizes = [1, 16], strides = [1, 1]} : vector<3x16xf32> to vector<1x16xf32>
    %24 = vector.extract_strided_slice %1 {offsets = [0, 2], sizes = [8, 1], strides = [1, 1]} : vector<8x3xf32> to vector<8x1xf32>
    %25 = vector.broadcast %23 : vector<1x16xf32> to vector<8x16xf32>
    %26 = vector.broadcast %24 : vector<8x1xf32> to vector<8x16xf32>
    %27 = arith.subf %25, %26 : vector<8x16xf32>
    %28 = arith.mulf %27, %27 : vector<8x16xf32>
    %29 = arith.addf %22, %28 : vector<8x16xf32>
    %cst_11 = arith.constant 5.625000e-01 : f32
    %30 = vector.broadcast %cst_11 : f32 to vector<8x16xf32>
    %31 = arith.cmpf ole, %29, %30 : vector<8x16xf32>
    %32 = arith.extui %31 : vector<8x16xi1> to vector<8x16xi32>
    %33 = arith.sitofp %32 : vector<8x16xi32> to vector<8x16xf32>
    %34 = vector.shape_cast %7 : vector<16x32xf32> to vector<1x16x32xf32>
    %35 = vector.shape_cast %3 : vector<8x32xf32> to vector<8x1x32xf32>
    %36 = vector.broadcast %34 : vector<1x16x32xf32> to vector<8x16x32xf32>
    %37 = vector.broadcast %35 : vector<8x1x32xf32> to vector<8x16x32xf32>
    %38 = arith.subf %36, %37 : vector<8x16x32xf32>
    %cst_12 = arith.constant 0.000000e+00 : f32
    %39 = vector.broadcast %cst_12 : f32 to vector<8x16x32xf32>
    %40 = arith.maximumf %38, %39 : vector<8x16x32xf32>
    %41 = vector.shape_cast %40 : vector<8x16x32xf32> to vector<128x32xf32>
    %c0_13 = arith.constant 0 : index
    %c0_14 = arith.constant 0 : index
    %42 = vector.load %arg6[%c0_13, %c0_14] : memref<32x32xf32, #tpu.memory_space<vmem>>, vector<32x32xf32>
    %43 = arith.truncf %41 : vector<128x32xf32> to vector<128x32xbf16>
    %44 = arith.truncf %42 : vector<32x32xf32> to vector<32x32xbf16>
    %cst_15 = arith.constant dense<0.000000e+00> : vector<128x32xf32>
    %45 = tpu.matmul %43, %44, %cst_15 {dimension_numbers = #tpu.dot_dimension_numbers<[1], [0], [0], [1], [0, 0, 1, 1], [], []>} : vector<128x32xbf16>, vector<32x32xbf16>, vector<128x32xf32> -> vector<128x32xf32>
    %c0_16 = arith.constant 0 : index
    %c0_17 = arith.constant 0 : index
    %46 = vector.load %arg7[%c0_16, %c0_17] : memref<1x32xf32, #tpu.memory_space<vmem>>, vector<1x32xf32>
    %47 = vector.broadcast %46 : vector<1x32xf32> to vector<128x32xf32>
    %48 = arith.addf %45, %47 : vector<128x32xf32>
    %cst_18 = arith.constant 0.000000e+00 : f32
    %49 = vector.broadcast %cst_18 : f32 to vector<128x32xf32>
    %50 = arith.maximumf %48, %49 : vector<128x32xf32>
    %51 = vector.shape_cast %50 : vector<128x32xf32> to vector<8x16x32xf32>
    %52 = vector.shape_cast %33 : vector<8x16xf32> to vector<8x16x1xf32>
    %53 = vector.broadcast %52 : vector<8x16x1xf32> to vector<8x16x32xf32>
    %54 = arith.mulf %51, %53 : vector<8x16x32xf32>
    %cst_19 = arith.constant dense<0xFF800000> : vector<8x32xf32>
    %55 = vector.multi_reduction <maximumf>, %54, %cst_19 [1] : vector<8x16x32xf32> to vector<8x32xf32>
    %56 = tpu.transpose %55, [1, 0] : vector<8x32xf32> -> vector<32x8xf32>
    %c0_20 = arith.constant 0 : index
    %c0_21 = arith.constant 0 : index
    %c0_22 = arith.constant 0 : index
    %57 = vector.load %arg8[%c0_20, %c0_21, %c0_22] : memref<1x32x8xf32, #tpu.memory_space<vmem>>, vector<1x32x8xf32>
    %58 = vector.shape_cast %57 : vector<1x32x8xf32> to vector<32x8xf32>
    %59 = vector.shape_cast %56 : vector<32x8xf32> to vector<1x32x8xf32>
    tpu.vector_store %arg8[%c0_20, %c0_21, %c0_22], %59 {strides = array<i32>} : memref<1x32x8xf32, #tpu.memory_space<vmem>>, vector<1x32x8xf32>,
    return
  }
  func.func @transform_0(%arg0: i32, %arg1: i32) -> (i32, i32, i32) {
    %c0_i32 = arith.constant 0 : i32
    %c0_i32_0 = arith.constant 0 : i32
    return %arg0, %arg1, %c0_i32 : i32, i32, i32
  }
  func.func @transform_1(%arg0: i32, %arg1: i32) -> (i32, i32, i32) {
    %c0_i32 = arith.constant 0 : i32
    %c0_i32_0 = arith.constant 0 : i32
    return %arg0, %arg1, %c0_i32 : i32, i32, i32
  }
  func.func @transform_2(%arg0: i32, %arg1: i32) -> (i32, i32, i32) {
    %c0_i32 = arith.constant 0 : i32
    %c0_i32_0 = arith.constant 0 : i32
    %c0_i32_1 = arith.constant 0 : i32
    return %arg0, %c0_i32, %c0_i32_0 : i32, i32, i32
  }
  func.func @transform_3(%arg0: i32, %arg1: i32) -> (i32, i32, i32) {
    %c0_i32 = arith.constant 0 : i32
    %c0_i32_0 = arith.constant 0 : i32
    %c0_i32_1 = arith.constant 0 : i32
    return %arg0, %c0_i32, %c0_i32_0 : i32, i32, i32
  }
  func.func @transform_4(%arg0: i32, %arg1: i32) -> (i32, i32) {
    %c0_i32 = arith.constant 0 : i32
    %c0_i32_0 = arith.constant 0 : i32
    %c0_i32_1 = arith.constant 0 : i32
    return %c0_i32, %c0_i32_0 : i32, i32
  }
  func.func @transform_5(%arg0: i32, %arg1: i32) -> (i32, i32) {
    %c0_i32 = arith.constant 0 : i32
    %c0_i32_0 = arith.constant 0 : i32
    %c0_i32_1 = arith.constant 0 : i32
    return %c0_i32, %c0_i32_0 : i32, i32
  }
  func.func @transform_6(%arg0: i32, %arg1: i32) -> (i32, i32, i32) {
    %c0_i32 = arith.constant 0 : i32
    %c0_i32_0 = arith.constant 0 : i32
    return %arg0, %c0_i32, %arg1 : i32, i32, i32
  }
}

</mosaic_0001>

<llo_original>
// kernel: tpu_custom_call.1
$region0: #{tpu_custom_call.1}
  #allocation0 [shape = 'u32[]', space=smem, size = 0x4, offset = 0x4, fixed_abs, tag = 'smem constant byte address 0x4 - core index']
  #allocation1 [shape = 'u32[144,128]{1,0:T(1,128)}', space=vmem, size = 0x12000, scoped, tag = 'internal scratch']
  %s0 = inlined_call_operand.vmem [shape: f32[2,8,3], index: 0, kind: input, shape index: {}]
  %s1 = inlined_call_operand.hbm [shape: f32[2,8,32], index: 1, kind: input, shape index: {}]
  %s2 = inlined_call_operand.vmem [shape: f32[2,3,16], index: 2, kind: input, shape index: {}]
  %s3 = inlined_call_operand.vmem [shape: f32[2,16,32], index: 3, kind: input, shape index: {}]
  %s4 = inlined_call_operand.hbm [shape: f32[32,32], index: 4, kind: input, shape index: {}]
  %s5 = inlined_call_operand.vmem [shape: f32[1,32], index: 5, kind: input, shape index: {}]
  %s6 = inlined_call_operand.vmem [shape: f32[2,32,8], index: 6, kind: output, shape index: {}]
  %s7 = sld [smem:[#allocation0]]
  $region65: #{tpu_custom_call.1} parent=0
    _
  %s9 = ssub.s32 1, %s7
  %s10 = scalar_select 0, %s9, %s7
  $region1: #{tpu_custom_call.1} parent=0
    #allocation2 [shape = 'u8[8192]{0}', space=vmem, size = 0x2000, scoped, tag = 'input window, operand 1']
    #allocation3 [shape = 's32[2]{0}', space=sflag, size = 0x8, scoped, tag = 'scoped memory for tpu_custom_call.1']
    #allocation4 [shape = 'u8[16384]{0}', space=vmem, size = 0x4000, scoped, tag = 'input window, operand 4, single buffered']
    #allocation5 [shape = 's32[1]{0}', space=sflag, size = 0x4, scoped, tag = 'scoped memory for tpu_custom_call.1']
    %11 = vsyncpa [#allocation3], 0
    %s12 = scalar_lea.sflag [#allocation3], 1
    %13 = vsyncpa %s12, 0
    %14 = vsyncpa [#allocation5], 0
    loop: start=0, step=1, limit=4
    $region2: #{tpu_custom_call.1} parent=1 // loop_pre_header
      _
    $region3: #{tpu_custom_call.1} parent=1 // loop_header
      %s16 = sphi 0, %s20
      %p17 = scmp.ge.s32.totalorder %s16, 4
      %s23 = sphi 0, %s35
      %s24 = sphi 0, %s31
      %s25 = sphi 0, %s23
      %s26 = sphi 0, %s24
      %s27 = sphi 0, %s25
      %s28 = sphi 0, %s26
      %s40 = sphi 0, %s42
      %s43 = sphi 0, %s40
      %s44 = sphi 0, %s43
      %s60 = sphi 0, %s44
      %s68 = sphi 0, %s70
      %s71 = sphi 0, %s68
      %s72 = sphi 0, %s71
      %s88 = sphi 0, %s72
      %s94 = sphi 0, %s96
      %s97 = sphi 0, %s94
      %s98 = sphi 0, %s97
      %s114 = sphi 0, %s98
      %s120 = sphi 0, %s122
      %s123 = sphi 0, %s120
      %s124 = sphi 0, %s123
      %s140 = sphi 0, %s124
      %s144 = sphi 0, %s144
      %s146 = sphi 0, %s144
      %s147 = sphi 0, %s146
      %s161 = sphi 0, %s147
      %s165 = sphi 0, %s165
      %s167 = sphi 0, %s165
      %s168 = sphi 0, %s167
      %s182 = sphi 0, %s168
      %s190 = sphi 0, %s192
      %s193 = sphi 0, %s190
      %s194 = sphi 0, %s193
      %s210 = sphi 0, %s194
    $region4: #{tpu_custom_call.1} parent=1 // loop_header_branch
      %19 = sbr.rel (%p17) target = $region8
    $region5: #{tpu_custom_call.1} parent=1 // loop_body
      %s21 = ssub.s32 %s16, 1
      %s22 = ssub.s32 %s16, 2
      %s29 = sadd.s32 1, %s24
      %p30 = scmp.ge.s32.totalorder %s29, 1
      %s31 = scalar_select %p30, 0, %s29
      %s32 = sadd.s32 1, %s23
      %s33 = scalar_select %p30, %s32, %s23
      %p34 = scmp.ge.s32.totalorder %s33, 2
      %s35 = scalar_select %p34, 0, %s33
      %s36 = ssub.s32 %s23, %s35
      %s37 = ssub.s32 %s24, %s31
      %s38 = sor.u32 %s36, %s37
      %p39 = scmp.eq.s32.totalorder %s38, 0
      %s41 = sadd.s32 %s40, 1
      %s42 = scalar_select %p39, %s40, %s41
      %p45 = pneg %p39
      %p46 = scmp.eq.s32.totalorder %s16, 1
      %p47 = por %p45, %p46
      %p48 = scmp.ne.s32.totalorder %s40, %s43
      %p49 = scmp.eq.s32.totalorder %s16, 0
      %p50 = por %p48, %p49
      %p51 = scmp.ne.s32.totalorder %s40, %s43
      %p52 = scmp.eq.s32.totalorder %s21, 1
      %p53 = por %p51, %p52
      %p54 = scmp.ne.s32.totalorder %s43, %s44
      %p55 = scmp.eq.s32.totalorder %s21, 0
      %p56 = por %p54, %p55
      %p57 = scmp.ne.s32.totalorder %s43, %s44
      %p58 = scmp.eq.s32.totalorder %s22, 1
      %p59 = por %p57, %p58
      %p61 = scmp.ne.s32.totalorder %s44, %s60
      %p62 = scmp.eq.s32.totalorder %s22, 0
      %p63 = por %p61, %p62
      %s64 = ssub.s32 %s23, %s35
      %s65 = ssub.s32 %s24, %s31
      %s66 = sor.u32 %s64, %s65
      %p67 = scmp.eq.s32.totalorder %s66, 0
      %s69 = sadd.s32 %s68, 1
      %s70 = scalar_select %p67, %s68, %s69
      %p73 = pneg %p67
      %p74 = scmp.eq.s32.totalorder %s16, 1
      %p75 = por %p73, %p74
      %p76 = scmp.ne.s32.totalorder %s68, %s71
      %p77 = scmp.eq.s32.totalorder %s16, 0
      %p78 = por %p76, %p77
      %p79 = scmp.ne.s32.totalorder %s68, %s71
      %p80 = scmp.eq.s32.totalorder %s21, 1
      %p81 = por %p79, %p80
      %p82 = scmp.ne.s32.totalorder %s71, %s72
      %p83 = scmp.eq.s32.totalorder %s21, 0
      %p84 = por %p82, %p83
      %p85 = scmp.ne.s32.totalorder %s71, %s72
      %p86 = scmp.eq.s32.totalorder %s22, 1
      %p87 = por %p85, %p86
      %p89 = scmp.ne.s32.totalorder %s72, %s88
      %p90 = scmp.eq.s32.totalorder %s22, 0
      %p91 = por %p89, %p90
      %s92 = ssub.s32 %s23, %s35
      %p93 = scmp.eq.s32.totalorder %s92, 0
      %s95 = sadd.s32 %s94, 1
      %s96 = scalar_select %p93, %s94, %s95
      %p99 = pneg %p93
      %p100 = scmp.eq.s32.totalorder %s16, 1
      %p101 = por %p99, %p100
      %p102 = scmp.ne.s32.totalorder %s94, %s97
      %p103 = scmp.eq.s32.totalorder %s16, 0
      %p104 = por %p102, %p103
      %p105 = scmp.ne.s32.totalorder %s94, %s97
      %p106 = scmp.eq.s32.totalorder %s21, 1
      %p107 = por %p105, %p106
      %p108 = scmp.ne.s32.totalorder %s97, %s98
      %p109 = scmp.eq.s32.totalorder %s21, 0
      %p110 = por %p108, %p109
      %p111 = scmp.ne.s32.totalorder %s97, %s98
      %p112 = scmp.eq.s32.totalorder %s22, 1
      %p113 = por %p111, %p112
      %p115 = scmp.ne.s32.totalorder %s98, %s114
      %p116 = scmp.eq.s32.totalorder %s22, 0
      %p117 = por %p115, %p116
      %s118 = ssub.s32 %s23, %s35
      %p119 = scmp.eq.s32.totalorder %s118, 0
      %s121 = sadd.s32 %s120, 1
      %s122 = scalar_select %p119, %s120, %s121
      %p125 = pneg %p119
      %p126 = scmp.eq.s32.totalorder %s16, 1
      %p127 = por %p125, %p126
      %p128 = scmp.ne.s32.totalorder %s120, %s123
      %p129 = scmp.eq.s32.totalorder %s16, 0
      %p130 = por %p128, %p129
      %p131 = scmp.ne.s32.totalorder %s120, %s123
      %p132 = scmp.eq.s32.totalorder %s21, 1
      %p133 = por %p131, %p132
      %p134 = scmp.ne.s32.totalorder %s123, %s124
      %p135 = scmp.eq.s32.totalorder %s21, 0
      %p136 = por %p134, %p135
      %p137 = scmp.ne.s32.totalorder %s123, %s124
      %p138 = scmp.eq.s32.totalorder %s22, 1
      %p139 = por %p137, %p138
      %p141 = scmp.ne.s32.totalorder %s124, %s140
      %p142 = scmp.eq.s32.totalorder %s22, 0
      %p143 = por %p141, %p142
      %s145 = sadd.s32 %s144, 1
      %p148 = scmp.eq.s32.totalorder %s16, 1
      %p149 = scmp.ne.s32.totalorder %s144, %s146
      %p150 = scmp.eq.s32.totalorder %s16, 0
      %p151 = por %p149, %p150
      %p152 = scmp.ne.s32.totalorder %s144, %s146
      %p153 = scmp.eq.s32.totalorder %s21, 1
      %p154 = por %p152, %p153
      %p155 = scmp.ne.s32.totalorder %s146, %s147
      %p156 = scmp.eq.s32.totalorder %s21, 0
      %p157 = por %p155, %p156
      %p158 = scmp.ne.s32.totalorder %s146, %s147
      %p159 = scmp.eq.s32.totalorder %s22, 1
      %p160 = por %p158, %p159
      %p162 = scmp.ne.s32.totalorder %s147, %s161
      %p163 = scmp.eq.s32.totalorder %s22, 0
      %p164 = por %p162, %p163
      %s166 = sadd.s32 %s165, 1
      %p169 = scmp.eq.s32.totalorder %s16, 1
      %p170 = scmp.ne.s32.totalorder %s165, %s167
      %p171 = scmp.eq.s32.totalorder %s16, 0
      %p172 = por %p170, %p171
      %p173 = scmp.ne.s32.totalorder %s165, %s167
      %p174 = scmp.eq.s32.totalorder %s21, 1
      %p175 = por %p173, %p174
      %p176 = scmp.ne.s32.totalorder %s167, %s168
      %p177 = scmp.eq.s32.totalorder %s21, 0
      %p178 = por %p176, %p177
      %p179 = scmp.ne.s32.totalorder %s167, %s168
      %p180 = scmp.eq.s32.totalorder %s22, 1
      %p181 = por %p179, %p180
      %p183 = scmp.ne.s32.totalorder %s168, %s182
      %p184 = scmp.eq.s32.totalorder %s22, 0
      %p185 = por %p183, %p184
      %s186 = ssub.s32 %s23, %s35
      %s187 = ssub.s32 %s24, %s31
      %s188 = sor.u32 %s186, %s187
      %p189 = scmp.eq.s32.totalorder %s188, 0
      %s191 = sadd.s32 %s190, 1
      %s192 = scalar_select %p189, %s190, %s191
      %p195 = pneg %p189
      %p196 = scmp.eq.s32.totalorder %s16, 1
      %p197 = por %p195, %p196
      %p198 = scmp.ne.s32.totalorder %s190, %s193
      %p199 = scmp.eq.s32.totalorder %s16, 0
      %p200 = por %p198, %p199
      %p201 = scmp.ne.s32.totalorder %s190, %s193
      %p202 = scmp.eq.s32.totalorder %s21, 1
      %p203 = por %p201, %p202
      %p204 = scmp.ne.s32.totalorder %s193, %s194
      %p205 = scmp.eq.s32.totalorder %s21, 0
      %p206 = por %p204, %p205
      %p207 = scmp.ne.s32.totalorder %s193, %s194
      %p208 = scmp.eq.s32.totalorder %s22, 1
      %p209 = por %p207, %p208
      %p211 = scmp.ne.s32.totalorder %s194, %s210
      %p212 = scmp.eq.s32.totalorder %s22, 0
      %p213 = por %p211, %p212
      %p214 = scmp.le.s32.totalorder 1, %s16
      %p215 = scmp.lt.s32.totalorder %s16, 3
      %p216 = pnand %p214, %p215
      %p217 = pneg %p216
      // Predicated region
      $region9: #{tpu_custom_call.1} parent=5 // pred_check
        _
      $region10: #{tpu_custom_call.1} parent=5 // pred_check_branch
        %219 = sbr.rel (%p216) target = $region12
      $region11: #{tpu_custom_call.1} parent=5 // pred_region
        %s220 = ssub.s32 %s16, 1
        // Predicated region
        $region13: #{tpu_custom_call.1} parent=11 // pred_check
          %p221 = pneg %p157
        $region14: #{tpu_custom_call.1} parent=11 // pred_check_branch
          %223 = sbr.rel (%p221) target = $region16
        $region15: #{tpu_custom_call.1} parent=11 // pred_region
          %s225 = ssub.s32 512, 512
          %226 = vsyncadd [#allocation5], %s225
          %s227 = sshll.u32 [#allocation4], 4
          %s228 = int_to_ptr.vmem [resolvable:$true] %s227
          %233 = dma.hbm_to_vmem [thread:$0]  %s4, 512, %s228, [#allocation5], 128, 128, 8
        $region16: #{tpu_custom_call.1} parent=11 // pred_fallthru
          _
        // Predicated region
        $region17: #{tpu_custom_call.1} parent=11 // pred_check
          %p234 = pneg %p178
        $region18: #{tpu_custom_call.1} parent=11 // pred_check_branch
          %236 = sbr.rel (%p234) target = $region20
        $region19: #{tpu_custom_call.1} parent=11 // pred_region
          _
        $region20: #{tpu_custom_call.1} parent=11 // pred_fallthru
          _
      $region12: #{tpu_custom_call.1} parent=5 // pred_fallthru
        _
      %p237 = scmp.lt.s32.totalorder %s16, 2
      // Predicated region
      $region21: #{tpu_custom_call.1} parent=5 // pred_check
        %p238 = pneg %p237
      $region22: #{tpu_custom_call.1} parent=5 // pred_check_branch
        %240 = sbr.rel (%p238) target = $region24
      $region23: #{tpu_custom_call.1} parent=5 // pred_region
        // Predicated region
        $region25: #{tpu_custom_call.1} parent=23 // pred_check
          %p241 = pneg %p50
        $region26: #{tpu_custom_call.1} parent=23 // pred_check_branch
          %243 = sbr.rel (%p241) target = $region28
        $region27: #{tpu_custom_call.1} parent=23 // pred_region
          %p244 = scmp.lt.s32.totalorder %s23, 1
          %s245 = scalar_select %p244, %s23, 1
          %p246 = scmp.lt.s32.totalorder %s24, 0
          %s247 = scalar_select %p246, %s24, 0
          %s248 = sadd.s32 %s247, %s245
          %s249 = smul.addr %s248, 8
          %s250 = scalar_lea.vmem %s0, %s249
        $region28: #{tpu_custom_call.1} parent=23 // pred_fallthru
          _
        // Predicated region
        $region29: #{tpu_custom_call.1} parent=23 // pred_check
          %p251 = pneg %p78
        $region30: #{tpu_custom_call.1} parent=23 // pred_check_branch
          %253 = sbr.rel (%p251) target = $region32
        $region31: #{tpu_custom_call.1} parent=23 // pred_region
          %s254 = sand.u32 %s68, 1
          %s255 = scalar_lea.sflag [#allocation3], %s254
          %s256 = sand.u32 %s68, 1
          %s257 = smul.addr %s256, 8
          %s258 = scalar_lea.vmem [#allocation2], %s257
          %s260 = ssub.s32 128, 128
          %261 = vsyncadd %s255, %s260
          %s262 = sadd.s32 %s24, %s23
          %s263 = smul.addr %s262, 128
          %s264 = scalar_lea.hbm %s1, %s263
          %s266 = sshll.u32 %s258, 4
          %s267 = int_to_ptr.vmem [resolvable:$true] %s266
          %269 = dma.hbm_to_vmem [thread:$0]  %s264, 128, %s267, %s255
        $region32: #{tpu_custom_call.1} parent=23 // pred_fallthru
          _
        // Predicated region
        $region33: #{tpu_custom_call.1} parent=23 // pred_check
          %p270 = pneg %p104
        $region34: #{tpu_custom_call.1} parent=23 // pred_check_branch
          %272 = sbr.rel (%p270) target = $region36
        $region35: #{tpu_custom_call.1} parent=23 // pred_region
          %p273 = scmp.lt.s32.totalorder %s23, 1
          %s274 = scalar_select %p273, %s23, 1
          %s275 = smul.addr %s274, 4
          %s276 = scalar_lea.vmem %s2, %s275
        $region36: #{tpu_custom_call.1} parent=23 // pred_fallthru
          _
        // Predicated region
        $region37: #{tpu_custom_call.1} parent=23 // pred_check
          %p277 = pneg %p130
        $region38: #{tpu_custom_call.1} parent=23 // pred_check_branch
          %279 = sbr.rel (%p277) target = $region40
        $region39: #{tpu_custom_call.1} parent=23 // pred_region
          %p280 = scmp.lt.s32.totalorder %s23, 1
          %s281 = scalar_select %p280, %s23, 1
          %s282 = smul.addr %s281, 2
          %s283 = smul.addr %s282, 8
          %s284 = scalar_lea.vmem %s3, %s283
        $region40: #{tpu_custom_call.1} parent=23 // pred_fallthru
          _
      $region24: #{tpu_custom_call.1} parent=5 // pred_fallthru
        _
      %p285 = scmp.le.s32.totalorder 1, %s16
      %p286 = scmp.lt.s32.totalorder %s16, 3
      %p287 = pnand %p285, %p286
      %p288 = pneg %p287
      // Predicated region
      $region41: #{tpu_custom_call.1} parent=5 // pred_check
        _
      $region42: #{tpu_custom_call.1} parent=5 // pred_check_branch
        %290 = sbr.rel (%p287) target = $region44
      $region43: #{tpu_custom_call.1} parent=5 // pred_region
        %s291 = ssub.s32 %s16, 1
        %s292 = sand.u32 %s71, 1
        %s293 = scalar_lea.sflag [#allocation3], %s292
        %s294 = sand.u32 %s71, 1
        %s295 = smul.addr %s294, 8
        %s296 = scalar_lea.vmem [#allocation2], %s295
        // Predicated region
        $region45: #{tpu_custom_call.1} parent=43 // pred_check
          %p297 = pneg %p84
        $region46: #{tpu_custom_call.1} parent=43 // pred_check_branch
          %299 = sbr.rel (%p297) target = $region48
        $region47: #{tpu_custom_call.1} parent=43 // pred_region
          %300 = dma.done %s293, 128
        $region48: #{tpu_custom_call.1} parent=43 // pred_fallthru
          _
        // Predicated region
        $region49: #{tpu_custom_call.1} parent=43 // pred_check
          %p301 = pneg %p157
        $region50: #{tpu_custom_call.1} parent=43 // pred_check_branch
          %303 = sbr.rel (%p301) target = $region52
        $region51: #{tpu_custom_call.1} parent=43 // pred_region
          %304 = dma.done [#allocation5], 512
        $region52: #{tpu_custom_call.1} parent=43 // pred_fallthru
          _
        %p305 = scmp.lt.s32.totalorder %s25, 1
        %s306 = scalar_select %p305, %s25, 1
        %p307 = scmp.lt.s32.totalorder %s26, 0
        %s308 = scalar_select %p307, %s26, 0
        %s309 = sadd.s32 %s308, %s306
        %s310 = smul.addr %s309, 8
        %s311 = scalar_lea.vmem %s0, %s310
        %p312 = pneg %p56
        %p313 = pneg %p53
        %s314 = sand.u32 %s71, 1
        %s315 = scalar_lea.sflag [#allocation3], %s314
        %s316 = sand.u32 %s71, 1
        %s317 = smul.addr %s316, 8
        %s318 = scalar_lea.vmem [#allocation2], %s317
        %p319 = pneg %p84
        %p320 = pneg %p81
        %p321 = scmp.lt.s32.totalorder %s25, 1
        %s322 = scalar_select %p321, %s25, 1
        %s323 = smul.addr %s322, 4
        %s324 = scalar_lea.vmem %s2, %s323
        %p325 = pneg %p110
        %p326 = pneg %p107
        %p327 = scmp.lt.s32.totalorder %s25, 1
        %s328 = scalar_select %p327, %s25, 1
        %s329 = smul.addr %s328, 2
        %s330 = smul.addr %s329, 8
        %s331 = scalar_lea.vmem %s3, %s330
        %p332 = pneg %p136
        %p333 = pneg %p133
        %p334 = pneg %p157
        %p335 = pneg %p154
        %p336 = pneg %p178
        %p337 = pneg %p175
        %p338 = pneg %p206
        %p339 = pneg %p203
        %p340 = scmp.lt.s32.totalorder %s25, 1
        %s341 = scalar_select %p340, %s25, 1
        %p342 = scmp.lt.s32.totalorder %s26, 0
        %s343 = scalar_select %p342, %s26, 0
        %s344 = smul.addr %s341, 4
        %s345 = sadd.s32 %s343, %s344
        %s346 = smul.addr %s345, 8
        %s347 = scalar_lea.vmem %s6, %s346
        %p348 = scmp.lt.s32.totalorder %s25, 1
        %s349 = scalar_select %p348, %s25, 1
        %p350 = scmp.lt.s32.totalorder %s26, 0
        %s351 = scalar_select %p350, %s26, 0
        %s352 = sadd.s32 %s351, %s349
        %s353 = smul.addr %s352, 8
        %s354 = scalar_lea.vmem %s0, %s353
        %p355 = scmp.lt.s32.totalorder %s25, 1
        %s356 = scalar_select %p355, %s25, 1
        %s357 = smul.addr %s356, 4
        %s358 = scalar_lea.vmem %s2, %s357
        %p359 = scmp.lt.s32.totalorder %s25, 1
        %s360 = scalar_select %p359, %s25, 1
        %s361 = smul.addr %s360, 2
        %s362 = smul.addr %s361, 8
        %s363 = scalar_lea.vmem %s3, %s362
        %p364 = scmp.lt.s32.totalorder %s25, 1
        %s365 = scalar_select %p364, %s25, 1
        %p366 = scmp.lt.s32.totalorder %s26, 0
        %s367 = scalar_select %p366, %s26, 0
        %s368 = smul.addr %s365, 4
        %s369 = sadd.s32 %s367, %s368
        %s370 = smul.addr %s369, 8
        %s371 = scalar_lea.vmem %s6, %s370
        %v373 = vld [vmem:[%s354] sm:$0xff]
        %v374 = vld [vmem:[%s296] sm:$0xff]
        %v375 = vld [vmem:[%s358] sm:$0x7]
        %v376 = vld [vmem:[%s363] sm:$0xff]
        %v377 = vld [vmem:[%s363 + $0x8] sm:$0xff]
        %v378 = vlaneseq
        %v379 = vshrl.u32 %v378, 7
        %v380 = vsub.s32 0, %v379
        %v381 = vrot.slane %v375, %v380
        %383 = vset.pattern.permute.xlu0 0
        %384 = vperm.xlu0 %383, %v373
        %v385 = vpop.permute.xlu0 %384
        %v387 = vsub.f32 %v381, %v385
        %v388 = vmul.f32 %v387, %v387
        %v389 = vadd.f32 %v388, 0.0
        %v390 = vlaneseq
        %v391 = vshrl.u32 %v390, 7
        %v392 = vsub.s32 1, %v391
        %v393 = vrot.slane %v375, %v392
        %394 = vset.pattern.permute.xlu0 1
        %395 = vperm.xlu0 %394, %v373
        %v396 = vpop.permute.xlu0 %395
        %v398 = vsub.f32 %v393, %v396
        %v399 = vmul.f32 %v398, %v398
        %v400 = vadd.f32 %v389, %v399
        %v401 = vlaneseq
        %v402 = vshrl.u32 %v401, 7
        %v403 = vsub.s32 2, %v402
        %v404 = vrot.slane %v375, %v403
        %405 = vset.pattern.permute.xlu0 2
        %406 = vperm.xlu0 %405, %v373
        %v407 = vpop.permute.xlu0 %406
        %v409 = vsub.f32 %v404, %v407
        %v410 = vmul.f32 %v409, %v409
        %v411 = vadd.f32 %v400, %v410
        %vm412 = vcmp.le.f32.partialorder %v411, 0.5625
        %v413 = vsel %vm412, 1, 0
        %v414 = vcvt.s32.f32 %v413
        %v416 = vcombine.high %v374, %v374
        %v418 = vunpack.c.l.s4 1966171168
        %v419 = vunpack.c.0.s8 %v418
        %v420 = vlaneseq
        %v421 = vshrl.u32 %v420, 7
        %v422 = vsub.s32 %v419, %v421
        %v423 = vrot.slane %v374, %v422
        %v425 = vunpack.c.l.s4 1966171168
        %v426 = vunpack.c.0.s8 %v425
        %v427 = vlaneseq
        %v428 = vshrl.u32 %v427, 7
        %v429 = vsub.s32 %v426, %v428
        %v430 = vrot.slane %v416, %v429
        %v431 = vcombine.high %v423, %v423
        %v432 = vcombine.high %v430, %v430
        %v434 = vunpack.c.l.s4 1966171168
        %v435 = vunpack.c.0.s8 %v434
        %v436 = vlaneseq
        %v437 = vshrl.u32 %v436, 7
        %v438 = vsub.s32 %v435, %v437
        %v439 = vrot.slane %v423, %v438
        %v441 = vunpack.c.l.s4 1966171168
        %v442 = vunpack.c.0.s8 %v441
        %v443 = vlaneseq
        %v444 = vshrl.u32 %v443, 7
        %v445 = vsub.s32 %v442, %v444
        %v446 = vrot.slane %v430, %v445
        %v448 = vunpack.c.l.s4 1966171168
        %v449 = vunpack.c.0.s8 %v448
        %v450 = vlaneseq
        %v451 = vshrl.u32 %v450, 7
        %v452 = vsub.s32 %v449, %v451
        %v453 = vrot.slane %v431, %v452
        %v455 = vunpack.c.l.s4 1966171168
        %v456 = vunpack.c.0.s8 %v455
        %v457 = vlaneseq
        %v458 = vshrl.u32 %v457, 7
        %v459 = vsub.s32 %v456, %v458
        %v460 = vrot.slane %v432, %v459
        %v461 = vcombine.high %v439, %v439
        %v462 = vcombine.high %v446, %v446
        %v463 = vcombine.high %v453, %v453
        %v464 = vcombine.high %v460, %v460
        %v465 = vlaneseq
        %v466 = vshrl.u32 %v465, 7
        %v467 = vsub.s32 0, %v466
        %v468 = vrot.slane %v439, %v467
        %v469 = vlaneseq
        %v470 = vshrl.u32 %v469, 7
        %v471 = vsub.s32 0, %v470
        %v472 = vrot.slane %v453, %v471
        %v473 = vlaneseq
        %v474 = vshrl.u32 %v473, 7
        %v475 = vsub.s32 0, %v474
        %v476 = vrot.slane %v461, %v475
        %v477 = vlaneseq
        %v478 = vshrl.u32 %v477, 7
        %v479 = vsub.s32 0, %v478
        %v480 = vrot.slane %v463, %v479
        %v481 = vlaneseq
        %v482 = vshrl.u32 %v481, 7
        %v483 = vsub.s32 0, %v482
        %v484 = vrot.slane %v446, %v483
        %v485 = vlaneseq
        %v486 = vshrl.u32 %v485, 7
        %v487 = vsub.s32 0, %v486
        %v488 = vrot.slane %v460, %v487
        %v489 = vlaneseq
        %v490 = vshrl.u32 %v489, 7
        %v491 = vsub.s32 0, %v490
        %v492 = vrot.slane %v462, %v491
        %v493 = vlaneseq
        %v494 = vshrl.u32 %v493, 7
        %v495 = vsub.s32 0, %v494
        %v496 = vrot.slane %v464, %v495
        %v505 = vsub.f32 %v376, %v468
        %v506 = vsub.f32 %v377, %v468
        %v507 = vsub.f32 %v376, %v472
        %v508 = vsub.f32 %v377, %v472
        %v509 = vsub.f32 %v376, %v476
        %v510 = vsub.f32 %v377, %v476
        %v511 = vsub.f32 %v376, %v480
        %v512 = vsub.f32 %v377, %v480
        %v513 = vsub.f32 %v376, %v484
        %v514 = vsub.f32 %v377, %v484
        %v515 = vsub.f32 %v376, %v488
        %v516 = vsub.f32 %v377, %v488
        %v517 = vsub.f32 %v376, %v492
        %v518 = vsub.f32 %v377, %v492
        %v519 = vsub.f32 %v376, %v496
        %v520 = vsub.f32 %v377, %v496
        %v521 = vmax.f32 %v505, 0.0
        %v522 = vmax.f32 %v506, 0.0
        %v523 = vmax.f32 %v507, 0.0
        %v524 = vmax.f32 %v508, 0.0
        %v525 = vmax.f32 %v509, 0.0
        %v526 = vmax.f32 %v510, 0.0
        %v527 = vmax.f32 %v511, 0.0
        %v528 = vmax.f32 %v512, 0.0
        %v529 = vmax.f32 %v513, 0.0
        %v530 = vmax.f32 %v514, 0.0
        %v531 = vmax.f32 %v515, 0.0
        %v532 = vmax.f32 %v516, 0.0
        %v533 = vmax.f32 %v517, 0.0
        %v534 = vmax.f32 %v518, 0.0
        %v535 = vmax.f32 %v519, 0.0
        %v536 = vmax.f32 %v520, 0.0
        %v537 = vld [vmem:[#allocation4] sm:$0xff]
        %v538 = vld [vmem:[#allocation4 + $0x8] sm:$0xff]
        %v539 = vld [vmem:[#allocation4 + $0x10] sm:$0xff]
        %v540 = vld [vmem:[#allocation4 + $0x18] sm:$0xff]
        %v541 = vpack.c.bf16 %v522, %v521
        %v542 = vpack.c.bf16 %v524, %v523
        %v543 = vpack.c.bf16 %v526, %v525
        %v544 = vpack.c.bf16 %v528, %v527
        %v545 = vpack.c.bf16 %v530, %v529
        %v546 = vpack.c.bf16 %v532, %v531
        %v547 = vpack.c.bf16 %v534, %v533
        %v548 = vpack.c.bf16 %v536, %v535
        %v549 = vpack.c.bf16 %v538, %v537
        %v550 = vpack.c.bf16 %v540, %v539
        %v551 = vld [vmem:[%s5] sm:$0x1]
        %v553 = vlaneseq
        %v554 = vshrl.u32 %v553, 7
        %v555 = vsub.s32 0, %v554
        %v556 = vrot.slane %v551, %v555
        %vm558 = vcmask 261120
        %v560 = vsel %vm558, %v541, 0
        %v563 = vsel %vm558, %v542, 0
        %v566 = vsel %vm558, %v543, 0
        %v569 = vsel %vm558, %v544, 0
        %v572 = vsel %vm558, %v545, 0
        %v575 = vsel %vm558, %v546, 0
        %v578 = vsel %vm558, %v547, 0
        %v581 = vsel %vm558, %v548, 0
        %583 = vmatprep.subr.bf16.mxu0 0
        %584 = vmatpush1.bf16.msra.mxu0 %v549
        %585 = vmatprep.subr.bf16.mxu0 0
        %586 = vmatpush1.bf16.msra.mxu0 %v550
        %587 = vmatprep.subr.bf16.mxu0 0
        %588 = vmatpush1.bf16.msra.mxu0 0
        %589 = vmatprep.subr.bf16.mxu0 0
        %590 = vmatpush1.bf16.msra.mxu0 0
        %591 = vmatprep.subr.bf16.mxu0 0
        %592 = vmatpush1.bf16.msra.mxu0 0
        %593 = vmatprep.subr.bf16.mxu0 0
        %594 = vmatpush1.bf16.msra.mxu0 0
        %595 = vmatprep.subr.bf16.mxu0 0
        %596 = vmatpush1.bf16.msra.mxu0 0
        %597 = vmatprep.subr.bf16.mxu0 0
        %598 = vmatpush1.bf16.msra.mxu0 0
        %599 = vmatprep.subr.bf16.mxu0 0
        %600 = vmatpush1.bf16.msra.mxu0 0
        %601 = vmatprep.subr.bf16.mxu0 0
        %602 = vmatpush1.bf16.msra.mxu0 0
        %603 = vmatprep.subr.bf16.mxu0 0
        %604 = vmatpush1.bf16.msra.mxu0 0
        %605 = vmatprep.subr.bf16.mxu0 0
        %606 = vmatpush1.bf16.msra.mxu0 0
        %607 = vmatprep.subr.bf16.mxu0 0
        %608 = vmatpush1.bf16.msra.mxu0 0
        %609 = vmatprep.subr.bf16.mxu0 0
        %610 = vmatpush1.bf16.msra.mxu0 0
        %611 = vmatprep.subr.bf16.mxu0 0
        %612 = vmatpush1.bf16.msra.mxu0 0
        %613 = vmatprep.subr.bf16.mxu0 0
        %614 = vmatpush1.bf16.msra.mxu0 0
        %615 = vmatprep.mubr.bf16.mxu0 0
        %616 = vmatmul.mubr.bf16.gmra.mrb[0].mxu0 %v560
        %v617 = vpop.f32.mrb[0].mxu0
        %v618 = vadd.f32 %v556, %v617
        %v619 = vpop.f32.mrb[0].mxu0
        %v620 = vpop.f32.mrb[0].mxu0
        %v621 = vadd.f32 %v556, %v620
        %v622 = vpop.f32.mrb[0].mxu0
        %623 = vmatprep.mubr.bf16.mxu0 0
        %624 = vmatmul.mubr.bf16.gmra.mrb[0].mxu0 %v563
        %v625 = vpop.f32.mrb[0].mxu0
        %v626 = vadd.f32 %v556, %v625
        %v627 = vpop.f32.mrb[0].mxu0
        %v628 = vpop.f32.mrb[0].mxu0
        %v629 = vadd.f32 %v556, %v628
        %v630 = vpop.f32.mrb[0].mxu0
        %631 = vmatprep.mubr.bf16.mxu0 0
        %632 = vmatmul.mubr.bf16.gmra.mrb[0].mxu0 %v566
        %v633 = vpop.f32.mrb[0].mxu0
        %v634 = vadd.f32 %v556, %v633
        %v635 = vpop.f32.mrb[0].mxu0
        %v636 = vpop.f32.mrb[0].mxu0
        %v637 = vadd.f32 %v556, %v636
        %v638 = vpop.f32.mrb[0].mxu0
        %639 = vmatprep.mubr.bf16.mxu0 0
        %640 = vmatmul.mubr.bf16.gmra.mrb[0].mxu0 %v569
        %v641 = vpop.f32.mrb[0].mxu0
        %v642 = vadd.f32 %v556, %v641
        %v643 = vpop.f32.mrb[0].mxu0
        %v644 = vpop.f32.mrb[0].mxu0
        %v645 = vadd.f32 %v556, %v644
        %v646 = vpop.f32.mrb[0].mxu0
        %647 = vmatprep.mubr.bf16.mxu0 0
        %648 = vmatmul.mubr.bf16.gmra.mrb[0].mxu0 %v572
        %v649 = vpop.f32.mrb[0].mxu0
        %v650 = vadd.f32 %v556, %v649
        %v651 = vpop.f32.mrb[0].mxu0
        %v652 = vpop.f32.mrb[0].mxu0
        %v653 = vadd.f32 %v556, %v652
        %v654 = vpop.f32.mrb[0].mxu0
        %655 = vmatprep.mubr.bf16.mxu0 0
        %656 = vmatmul.mubr.bf16.gmra.mrb[0].mxu0 %v575
        %v657 = vpop.f32.mrb[0].mxu0
        %v658 = vadd.f32 %v556, %v657
        %v659 = vpop.f32.mrb[0].mxu0
        %v660 = vpop.f32.mrb[0].mxu0
        %v661 = vadd.f32 %v556, %v660
        %v662 = vpop.f32.mrb[0].mxu0
        %663 = vmatprep.mubr.bf16.mxu0 0
        %664 = vmatmul.mubr.bf16.gmra.mrb[0].mxu0 %v578
        %v665 = vpop.f32.mrb[0].mxu0
        %v666 = vadd.f32 %v556, %v665
        %v667 = vpop.f32.mrb[0].mxu0
        %v668 = vpop.f32.mrb[0].mxu0
        %v669 = vadd.f32 %v556, %v668
        %v670 = vpop.f32.mrb[0].mxu0
        %671 = vmatprep.mubr.bf16.mxu0 0
        %672 = vmatmul.mubr.bf16.gmra.mrb[0].mxu0 %v581
        %v673 = vpop.f32.mrb[0].mxu0
        %v674 = vadd.f32 %v556, %v673
        %v675 = vpop.f32.mrb[0].mxu0
        %v676 = vpop.f32.mrb[0].mxu0
        %v677 = vadd.f32 %v556, %v676
        %v678 = vpop.f32.mrb[0].mxu0
        %679 = vdwg.mxu0
        %v680 = vmax.f32 %v618, 0.0
        %v681 = vmax.f32 %v621, 0.0
        %v682 = vmax.f32 %v626, 0.0
        %v683 = vmax.f32 %v629, 0.0
        %v684 = vmax.f32 %v634, 0.0
        %v685 = vmax.f32 %v637, 0.0
        %v686 = vmax.f32 %v642, 0.0
        %v687 = vmax.f32 %v645, 0.0
        %v688 = vmax.f32 %v650, 0.0
        %v689 = vmax.f32 %v653, 0.0
        %v690 = vmax.f32 %v658, 0.0
        %v691 = vmax.f32 %v661, 0.0
        %v692 = vmax.f32 %v666, 0.0
        %v693 = vmax.f32 %v669, 0.0
        %v694 = vmax.f32 %v674, 0.0
        %v695 = vmax.f32 %v677, 0.0
        %v696 = vlaneseq
        %v697 = vshrl.u32 %v696, 7
        %v698 = vsub.s32 0, %v697
        %v699 = vrot.slane %v414, %v698
        %701 = vbcast.lane.b32.xlu0 %v699, 256
        %v702 = vpop.permute.xlu0 %701
        %s704 = sor.u32 256, 8
        %705 = vbcast.lane.b32.xlu0 %v699, %s704
        %v706 = vpop.permute.xlu0 %705
        %v707 = vlaneseq
        %v708 = vshrl.u32 %v707, 7
        %v709 = vsub.s32 1, %v708
        %v710 = vrot.slane %v414, %v709
        %712 = vbcast.lane.b32.xlu0 %v710, 256
        %v713 = vpop.permute.xlu0 %712
        %s715 = sor.u32 256, 8
        %716 = vbcast.lane.b32.xlu0 %v710, %s715
        %v717 = vpop.permute.xlu0 %716
        %v718 = vlaneseq
        %v719 = vshrl.u32 %v718, 7
        %v720 = vsub.s32 2, %v719
        %v721 = vrot.slane %v414, %v720
        %723 = vbcast.lane.b32.xlu0 %v721, 256
        %v724 = vpop.permute.xlu0 %723
        %s726 = sor.u32 256, 8
        %727 = vbcast.lane.b32.xlu0 %v721, %s726
        %v728 = vpop.permute.xlu0 %727
        %v729 = vlaneseq
        %v730 = vshrl.u32 %v729, 7
        %v731 = vsub.s32 3, %v730
        %v732 = vrot.slane %v414, %v731
        %734 = vbcast.lane.b32.xlu0 %v732, 256
        %v735 = vpop.permute.xlu0 %734
        %s737 = sor.u32 256, 8
        %738 = vbcast.lane.b32.xlu0 %v732, %s737
        %v739 = vpop.permute.xlu0 %738
        %v740 = vlaneseq
        %v741 = vshrl.u32 %v740, 7
        %v742 = vsub.s32 4, %v741
        %v743 = vrot.slane %v414, %v742
        %745 = vbcast.lane.b32.xlu0 %v743, 256
        %v746 = vpop.permute.xlu0 %745
        %s748 = sor.u32 256, 8
        %749 = vbcast.lane.b32.xlu0 %v743, %s748
        %v750 = vpop.permute.xlu0 %749
        %v751 = vlaneseq
        %v752 = vshrl.u32 %v751, 7
        %v753 = vsub.s32 5, %v752
        %v754 = vrot.slane %v414, %v753
        %756 = vbcast.lane.b32.xlu0 %v754, 256
        %v757 = vpop.permute.xlu0 %756
        %s759 = sor.u32 256, 8
        %760 = vbcast.lane.b32.xlu0 %v754, %s759
        %v761 = vpop.permute.xlu0 %760
        %v762 = vlaneseq
        %v763 = vshrl.u32 %v762, 7
        %v764 = vsub.s32 6, %v763
        %v765 = vrot.slane %v414, %v764
        %767 = vbcast.lane.b32.xlu0 %v765, 256
        %v768 = vpop.permute.xlu0 %767
        %s770 = sor.u32 256, 8
        %771 = vbcast.lane.b32.xlu0 %v765, %s770
        %v772 = vpop.permute.xlu0 %771
        %v773 = vlaneseq
        %v774 = vshrl.u32 %v773, 7
        %v775 = vsub.s32 7, %v774
        %v776 = vrot.slane %v414, %v775
        %778 = vbcast.lane.b32.xlu0 %v776, 256
        %v779 = vpop.permute.xlu0 %778
        %s781 = sor.u32 256, 8
        %782 = vbcast.lane.b32.xlu0 %v776, %s781
        %v783 = vpop.permute.xlu0 %782
        %v784 = vmul.f32 %v680, %v702
        %v785 = vmul.f32 %v681, %v706
        %v786 = vmul.f32 %v682, %v713
        %v787 = vmul.f32 %v683, %v717
        %v788 = vmul.f32 %v684, %v724
        %v789 = vmul.f32 %v685, %v728
        %v790 = vmul.f32 %v686, %v735
        %v791 = vmul.f32 %v687, %v739
        %v792 = vmul.f32 %v688, %v746
        %v793 = vmul.f32 %v689, %v750
        %v794 = vmul.f32 %v690, %v757
        %v795 = vmul.f32 %v691, %v761
        %v796 = vmul.f32 %v692, %v768
        %v797 = vmul.f32 %v693, %v772
        %v798 = vmul.f32 %v694, %v779
        %v799 = vmul.f32 %v695, %v783
        %v800 = vsel %vm558, %v784, -inf
        %v801 = vsel %vm558, %v785, -inf
        %v802 = vmax.f32 %v800, %v801
        %v803 = vrot.slane %v802, 4
        %v804 = vmax.f32 %v802, %v803
        %v805 = vrot.slane %v804, 2
        %v806 = vmax.f32 %v804, %v805
        %v807 = vrot.slane %v806, 1
        %v808 = vmax.f32 %v806, %v807
        %v809 = vsel %vm558, %v786, -inf
        %v810 = vsel %vm558, %v787, -inf
        %v811 = vmax.f32 %v809, %v810
        %v812 = vrot.slane %v811, 4
        %v813 = vmax.f32 %v811, %v812
        %v814 = vrot.slane %v813, 2
        %v815 = vmax.f32 %v813, %v814
        %v816 = vrot.slane %v815, 1
        %v817 = vmax.f32 %v815, %v816
        %v818 = vsel %vm558, %v788, -inf
        %v819 = vsel %vm558, %v789, -inf
        %v820 = vmax.f32 %v818, %v819
        %v821 = vrot.slane %v820, 4
        %v822 = vmax.f32 %v820, %v821
        %v823 = vrot.slane %v822, 2
        %v824 = vmax.f32 %v822, %v823
        %v825 = vrot.slane %v824, 1
        %v826 = vmax.f32 %v824, %v825
        %v827 = vsel %vm558, %v790, -inf
        %v828 = vsel %vm558, %v791, -inf
        %v829 = vmax.f32 %v827, %v828
        %v830 = vrot.slane %v829, 4
        %v831 = vmax.f32 %v829, %v830
        %v832 = vrot.slane %v831, 2
        %v833 = vmax.f32 %v831, %v832
        %v834 = vrot.slane %v833, 1
        %v835 = vmax.f32 %v833, %v834
        %v836 = vsel %vm558, %v792, -inf
        %v837 = vsel %vm558, %v793, -inf
        %v838 = vmax.f32 %v836, %v837
        %v839 = vrot.slane %v838, 4
        %v840 = vmax.f32 %v838, %v839
        %v841 = vrot.slane %v840, 2
        %v842 = vmax.f32 %v840, %v841
        %v843 = vrot.slane %v842, 1
        %v844 = vmax.f32 %v842, %v843
        %v845 = vsel %vm558, %v794, -inf
        %v846 = vsel %vm558, %v795, -inf
        %v847 = vmax.f32 %v845, %v846
        %v848 = vrot.slane %v847, 4
        %v849 = vmax.f32 %v847, %v848
        %v850 = vrot.slane %v849, 2
        %v851 = vmax.f32 %v849, %v850
        %v852 = vrot.slane %v851, 1
        %v853 = vmax.f32 %v851, %v852
        %v854 = vsel %vm558, %v796, -inf
        %v855 = vsel %vm558, %v797, -inf
        %v856 = vmax.f32 %v854, %v855
        %v857 = vrot.slane %v856, 4
        %v858 = vmax.f32 %v856, %v857
        %v859 = vrot.slane %v858, 2
        %v860 = vmax.f32 %v858, %v859
        %v861 = vrot.slane %v860, 1
        %v862 = vmax.f32 %v860, %v861
        %v863 = vsel %vm558, %v798, -inf
        %v864 = vsel %vm558, %v799, -inf
        %v865 = vmax.f32 %v863, %v864
        %v866 = vrot.slane %v865, 4
        %v867 = vmax.f32 %v865, %v866
        %v868 = vrot.slane %v867, 2
        %v869 = vmax.f32 %v867, %v868
        %v870 = vrot.slane %v869, 1
        %v871 = vmax.f32 %v869, %v870
        %vm880 = vcmask 1041409
        %v881 = vsel %vm880, %v817, %v808
        %vm882 = vcmask 1042434
        %v883 = vsel %vm882, %v826, %v881
        %vm884 = vcmask 1043459
        %v885 = vsel %vm884, %v835, %v883
        %vm886 = vcmask 1044484
        %v887 = vsel %vm886, %v844, %v885
        %vm888 = vcmask 1045509
        %v889 = vsel %vm888, %v853, %v887
        %vm890 = vcmask 1046534
        %v891 = vsel %vm890, %v862, %v889
        %vm892 = vcmask 1047559
        %v893 = vsel %vm892, %v871, %v891
        %895 = vxpose.xlu0.b32.start [1/16] %v893, 128
        %896 = vxpose.xlu0.b32.cont [2/16] 0.0, 128
        %897 = vxpose.xlu0.b32.cont [3/16] 0.0, 128
        %898 = vxpose.xlu0.b32.cont [4/16] 0.0, 128
        %899 = vxpose.xlu0.b32.cont [5/16] 0.0, 128
        %900 = vxpose.xlu0.b32.cont [6/16] 0.0, 128
        %901 = vxpose.xlu0.b32.cont [7/16] 0.0, 128
        %902 = vxpose.xlu0.b32.cont [8/16] 0.0, 128
        %903 = vxpose.xlu0.b32.cont [9/16] 0.0, 128
        %904 = vxpose.xlu0.b32.cont [10/16] 0.0, 128
        %905 = vxpose.xlu0.b32.cont [11/16] 0.0, 128
        %906 = vxpose.xlu0.b32.cont [12/16] 0.0, 128
        %907 = vxpose.xlu0.b32.cont [13/16] 0.0, 128
        %908 = vxpose.xlu0.b32.cont [14/16] 0.0, 128
        %909 = vxpose.xlu0.b32.cont [15/16] 0.0, 128
        %910 = vxpose.xlu0.b32.end [16/16] 0.0, 128
        %v911 = vpop.trf.xlu0
        %v912 = vpop.trf.xlu0
        %v913 = vpop.trf.xlu0
        %v914 = vpop.trf.xlu0
        %v915 = vpop.trf.xlu0
        %v916 = vpop.trf.xlu0
        %v917 = vpop.trf.xlu0
        %v918 = vpop.trf.xlu0
        %v919 = vpop.trf.xlu0
        %v920 = vpop.trf.xlu0
        %v921 = vpop.trf.xlu0
        %v922 = vpop.trf.xlu0
        %v923 = vpop.trf.xlu0
        %v924 = vpop.trf.xlu0
        %v925 = vpop.trf.xlu0
        %v926 = vpop.trf.xlu0
        %vm927 = vcmask 64512
        %928 = vst.msk [vmem:[%s371] sm:$0xff] %vm927, %v911
        %929 = vst.msk [vmem:[%s371 + $0x8] sm:$0xff] %vm927, %v912
        %930 = vst.msk [vmem:[%s371 + $0x10] sm:$0xff] %vm927, %v913
        %931 = vst.msk [vmem:[%s371 + $0x18] sm:$0xff] %vm927, %v914
        %p932 = scmp.lt.s32.totalorder %s25, 1
        %s933 = scalar_select %p932, %s25, 1
        %p934 = scmp.lt.s32.totalorder %s26, 0
        %s935 = scalar_select %p934, %s26, 0
        %s936 = smul.addr %s933, 4
        %s937 = sadd.s32 %s935, %s936
        %s938 = smul.addr %s937, 8
        %s939 = scalar_lea.vmem %s6, %s938
        // Predicated region
        $region53: #{tpu_custom_call.1} parent=43 // pred_check
          %p940 = pneg %p203
        $region54: #{tpu_custom_call.1} parent=43 // pred_check_branch
          %942 = sbr.rel (%p940) target = $region56
        $region55: #{tpu_custom_call.1} parent=43 // pred_region
          _
        $region56: #{tpu_custom_call.1} parent=43 // pred_fallthru
          _
      $region44: #{tpu_custom_call.1} parent=5 // pred_fallthru
        _
      %p943 = scmp.le.s32.totalorder 2, %s16
      // Predicated region
      $region57: #{tpu_custom_call.1} parent=5 // pred_check
        %p944 = pneg %p943
      $region58: #{tpu_custom_call.1} parent=5 // pred_check_branch
        %946 = sbr.rel (%p944) target = $region60
      $region59: #{tpu_custom_call.1} parent=5 // pred_region
        %s947 = ssub.s32 %s16, 2
        // Predicated region
        $region61: #{tpu_custom_call.1} parent=59 // pred_check
          %p948 = pneg %p209
        $region62: #{tpu_custom_call.1} parent=59 // pred_check_branch
          %950 = sbr.rel (%p948) target = $region64
        $region63: #{tpu_custom_call.1} parent=59 // pred_region
          %p951 = scmp.lt.s32.totalorder %s27, 1
          %s952 = scalar_select %p951, %s27, 1
          %p953 = scmp.lt.s32.totalorder %s28, 0
          %s954 = scalar_select %p953, %s28, 0
          %s955 = smul.addr %s952, 4
          %s956 = sadd.s32 %s954, %s955
          %s957 = smul.addr %s956, 8
          %s958 = scalar_lea.vmem %s6, %s957
        $region64: #{tpu_custom_call.1} parent=59 // pred_fallthru
          _
      $region60: #{tpu_custom_call.1} parent=5 // pred_fallthru
        _
    $region6: #{tpu_custom_call.1} parent=1 // loop_footer
      %s20 = sadd.s32 1, %s16
    $region7: #{tpu_custom_call.1} parent=1 // loop_footer_branch
      %15 = sbr.rel target = $region3
    $region8: #{tpu_custom_call.1} parent=1 // loop_exit
      _
    %959 = vsyncpa [#allocation3], 1
    %s960 = scalar_lea.sflag [#allocation3], 1
    %961 = vsyncpa %s960, 1
    %962 = vsyncpa [#allocation5], 1

</llo_original>
